<compile_context>
chip_gen: v7x
topology: tpu7x:2x2x1
jax: 0.10.0
libtpu: 0.0.40
codegen_flags: <defaults>
</compile_context>

<pallas_src>
import jax
import jax.numpy as jnp
from jax.experimental import pallas as pl
from jax.experimental.pallas import tpu as pltpu

TOKEN_NUM = 10
TOKEN_EMBEDDING_SIZE = 384
NUM_HEADS = 8
HEAD_DIM = TOKEN_EMBEDDING_SIZE // NUM_HEADS     # 48
REFERENCE_DIM = 128                              # d_q
KEY_DIM = HEAD_DIM                               # d_k = 48 (softmax scale)
SLOT = 16                                        # 16-lane score slot per head
SCORE_LANES = NUM_HEADS * SLOT                   # 128 == one full lane width

MAX_TILE_ROWS = 1024   # I/O + intermediates stay well under the 16 MiB (v5e)
                       # scoped-VMEM default; far under v6e/v7x budgets.
MIN_SPLIT_ROWS = 256   # once there is this much work per TC, force >=2 grid
                       # steps so v7x's two TensorCores both get a share.


def _round_up(x, m):
    return (x + m - 1) // m * m


def stl_kernel(x_ref, wq_ref, ktb_ref, vb_ref, o_ref):
    # x_ref  : [tile, 128]  f32  query rows (T_q == 1 squeezed away)
    # wq_ref : [128, 384]   bf16 head-concatenated Wq^T
    # ktb_ref: [384, 128]   bf16 block-diag keys^T (pre-scaled by 1/sqrt(48));
    #                       head h lives in rows [48h,48h+48) x lanes [16h,16h+10)
    # vb_ref : [128, 384]   bf16 block-diag values; head h in rows
    #                       [16h,16h+10) x cols [48h,48h+48)
    # o_ref  : [tile, 384]  bf16
    x = x_ref[...].astype(jnp.bfloat16)                                  # VPU cast

    # Fused Q projection for all 8 heads: one lane-dense MXU pass.
    q = jnp.dot(x, wq_ref[...], preferred_element_type=jnp.float32)     # [T,384]

    # All heads' scores in one matmul; head h occupies lanes [16h, 16h+10).
    s = jnp.dot(q.astype(jnp.bfloat16), ktb_ref[...],
                preferred_element_type=jnp.float32)                     # [T,128]

    lane = jax.lax.broadcasted_iota(jnp.int32, s.shape, 1)
    # Padded slot lanes (score exactly 0 from the zero columns) must not get
    # softmax mass: push them to -1e30 before exp.
    s = jnp.where((lane & (SLOT - 1)) < TOKEN_NUM, s, -1e30)

    # Segmented (per 16-lane head slot) all-reduce via an XOR butterfly of
    # lane rotations: stays lane-dense, runs on the XLU slot, and gives the
    # exact per-head max/sum (padding lanes never win the max / add 0).
    def seg_allreduce(v, combine):
        for d in (8, 4, 2, 1):
            fwd = pltpu.roll(v, shift=SCORE_LANES - d, axis=1)   # value @ lane l+d
            bwd = pltpu.roll(v, shift=d, axis=1)                 # value @ lane l-d
            v = combine(v, jnp.where((lane & d) == 0, fwd, bwd))
        return v

    m = seg_allreduce(s, jnp.maximum)           # per-head max, broadcast in-slot
    p = jnp.exp(s - m)                          # padded lanes -> exp(-1e30) == 0
    den = seg_allreduce(p, jnp.add)             # per-head sum, broadcast in-slot
    p = p * pl.reciprocal(den, approx=True)     # EUP approx path

    # Block-diagonal value matmul: result lands directly head-concatenated,
    # lane-dense [T, 384] -- single unmasked store.
    out = jnp.dot(p.astype(jnp.bfloat16), vb_ref[...],
                  preferred_element_type=jnp.float32)
    o_ref[...] = out.astype(o_ref.dtype)


def prepare_stl_params(embed, wq, wk, wv):
    """One-time (parameter-load-time) preprocessing.

    embed: [10, 48]; wq/wk/wv: PyTorch-layout [out, in] Linear weights.
    Returns (Wq^T bf16 [128,384], block-diag K^T bf16 [384,128],
             block-diag V bf16 [128,384]); K/V are fully precomputed since
    they depend only on parameters, and keys carry the 1/sqrt(48) scale.
    """
    embed = jnp.asarray(embed, jnp.float32)
    wq = jnp.asarray(wq, jnp.float32)
    wk = jnp.asarray(wk, jnp.float32)
    wv = jnp.asarray(wv, jnp.float32)

    keys = jnp.tanh(embed)                                        # [10, 48]
    k_proj = (keys @ wk.T) * (1.0 / (KEY_DIM ** 0.5))             # [10, 384] pre-scaled
    v_proj = keys @ wv.T                                          # [10, 384]

    k_h = k_proj.reshape(TOKEN_NUM, NUM_HEADS, HEAD_DIM).transpose(1, 0, 2)  # [8,10,48]
    v_h = v_proj.reshape(TOKEN_NUM, NUM_HEADS, HEAD_DIM).transpose(1, 0, 2)  # [8,10,48]

    ktb = jnp.zeros((TOKEN_EMBEDDING_SIZE, SCORE_LANES), jnp.float32)   # [384,128]
    vb = jnp.zeros((SCORE_LANES, TOKEN_EMBEDDING_SIZE), jnp.float32)    # [128,384]
    for h in range(NUM_HEADS):
        ktb = ktb.at[h * HEAD_DIM:(h + 1) * HEAD_DIM,
                     h * SLOT:h * SLOT + TOKEN_NUM].set(k_h[h].T)       # [48,10]
        vb = vb.at[h * SLOT:h * SLOT + TOKEN_NUM,
                   h * HEAD_DIM:(h + 1) * HEAD_DIM].set(v_h[h])         # [10,48]

    wq_t = wq.T                                                    # [128, 384]
    return (wq_t.astype(jnp.bfloat16),
            ktb.astype(jnp.bfloat16),
            vb.astype(jnp.bfloat16))


def stl_forward(inputs, params, out_dtype=jnp.bfloat16):
    """inputs: [N, 128] (f32 or bf16); params from prepare_stl_params.

    Returns [N, 1, 384]. Pass out_dtype=jnp.float32 if the consumer needs f32.
    """
    wq_t, ktb, vb = params
    n = inputs.shape[0]

    tile = min(MAX_TILE_ROWS, _round_up(n, 8))
    if pl.cdiv(n, tile) == 1 and n >= 2 * MIN_SPLIT_ROWS:
        tile = _round_up(pl.cdiv(n, 2), 8)      # >=2 grid steps -> both v7x TCs
    grid = (pl.cdiv(n, tile),)                  # partial last block masked by Pallas

    out = pl.pallas_call(
        stl_kernel,
        out_shape=jax.ShapeDtypeStruct((n, TOKEN_EMBEDDING_SIZE), out_dtype),
        grid=grid,
        in_specs=[
            pl.BlockSpec((tile, REFERENCE_DIM), lambda i: (i, 0)),
            pl.BlockSpec((REFERENCE_DIM, TOKEN_EMBEDDING_SIZE), lambda i: (0, 0)),
            pl.BlockSpec((TOKEN_EMBEDDING_SIZE, SCORE_LANES), lambda i: (0, 0)),
            pl.BlockSpec((SCORE_LANES, TOKEN_EMBEDDING_SIZE), lambda i: (0, 0)),
        ],
        out_specs=pl.BlockSpec((tile, TOKEN_EMBEDDING_SIZE), lambda i: (i, 0)),
        compiler_params=pltpu.CompilerParams(
            dimension_semantics=("parallel",),
            vmem_limit_bytes=48 * 1024 * 1024,
        ),
    )(inputs, wq_t, ktb, vb)

    return out.reshape(n, 1, TOKEN_EMBEDDING_SIZE)


def _reference(inputs, embed, wq, wk, wv):
    """Pure-JAX f32 reference mirroring the PyTorch STL forward."""
    n = inputs.shape[0]
    query = inputs[:, None, :]                                    # [N, 1, 128]
    keys = jnp.broadcast_to(jnp.tanh(embed)[None], (n, TOKEN_NUM, HEAD_DIM))
    q = query @ wq.T                                              # [N, 1, 384]
    k = keys @ wk.T                                               # [N, 10, 384]
    v = keys @ wv.T                                               # [N, 10, 384]
    qh = jnp.stack(jnp.split(q, NUM_HEADS, axis=2), axis=0)       # [8, N, 1, 48]
    kh = jnp.stack(jnp.split(k, NUM_HEADS, axis=2), axis=0)       # [8, N, 10, 48]
    vh = jnp.stack(jnp.split(v, NUM_HEADS, axis=2), axis=0)
    scores = jnp.matmul(qh, jnp.swapaxes(kh, 2, 3)) / (KEY_DIM ** 0.5)
    scores = jax.nn.softmax(scores, axis=3)
    out = jnp.matmul(scores, vh)                                  # [8, N, 1, 48]
    out = jnp.concatenate(jnp.split(out, NUM_HEADS, axis=0), axis=3)[0]  # [N, 1, 384]
    return out


if __name__ == "__main__":
    key = jax.random.PRNGKey(0)
    k_in, k_in2, k_emb, k_q, k_k, k_v = jax.random.split(key, 6)

    # Deterministic synthetic parameters mirroring the module's shapes.
    embed = 0.5 * jax.random.normal(k_emb, (TOKEN_NUM, HEAD_DIM), dtype=jnp.float32)
    # nn.Linear default-ish uniform(-1/sqrt(in), 1/sqrt(in)), PyTorch layout [out, in].
    wq = jax.random.uniform(k_q, (TOKEN_EMBEDDING_SIZE, REFERENCE_DIM),
                            minval=-1.0, maxval=1.0) / (REFERENCE_DIM ** 0.5)
    wk = jax.random.uniform(k_k, (TOKEN_EMBEDDING_SIZE, HEAD_DIM),
                            minval=-1.0, maxval=1.0) / (HEAD_DIM ** 0.5)
    wv = jax.random.uniform(k_v, (TOKEN_EMBEDDING_SIZE, HEAD_DIM),
                            minval=-1.0, maxval=1.0) / (HEAD_DIM ** 0.5)

    # One-time parameter preprocessing (amortized across forward calls).
    params = prepare_stl_params(embed, wq, wk, wv)
    params = jax.tree_util.tree_map(jax.block_until_ready, params)

    # Small batch (module-default scale) plus a larger ragged batch that
    # exercises the multi-step grid and the masked partial last block.
    for k_x, n in ((k_in, 2), (k_in2, 600)):
        inputs = jax.random.normal(k_x, (n, REFERENCE_DIM), dtype=jnp.float32)
        style_embed = stl_forward(inputs, params)
        jax.block_until_ready(style_embed)

        ref = _reference(inputs, embed, wq, wk, wv)
        assert style_embed.shape == (n, 1, TOKEN_EMBEDDING_SIZE)
        err = float(jnp.max(jnp.abs(style_embed.astype(jnp.float32) - ref)))
        # bf16 matmul operands + bf16 output + approx reciprocal -> loose tolerance.
        assert err < 3e-2, err

    print("KERNEL_OK")
</pallas_src>

<mosaic_0001>
module attributes {stable_mosaic.version = 11 : i64} {
  func.func @stl_kernel(%arg0: i32, %arg1: memref<8x128xf32, #tpu.memory_space<vmem>>, %arg2: memref<128x384xbf16, #tpu.memory_space<vmem>>, %arg3: memref<384x128xbf16, #tpu.memory_space<vmem>>, %arg4: memref<128x384xbf16, #tpu.memory_space<vmem>>, %arg5: memref<8x384xbf16, #tpu.memory_space<vmem>>) attributes {dimension_semantics = [#tpu.dimension_semantics<parallel>], iteration_bounds = array<i64: 1>, scalar_prefetch = 0 : i64, scratch_operands = 0 : i64, tpu.core_type = #tpu.core_type<tc>, window_params = [{transform_indices = @transform_0, window_bounds = array<i64: 8, 128>}, {pipeline_mode = #tpu.pipeline_mode<synchronous>, transform_indices = @transform_1, window_bounds = array<i64: 128, 384>}, {pipeline_mode = #tpu.pipeline_mode<synchronous>, transform_indices = @transform_2, window_bounds = array<i64: 384, 128>}, {pipeline_mode = #tpu.pipeline_mode<synchronous>, transform_indices = @transform_3, window_bounds = array<i64: 128, 384>}, {transform_indices = @transform_4, window_bounds = array<i64: 8, 384>}]} {
    %c0 = arith.constant 0 : index
    %c0_0 = arith.constant 0 : index
    %0 = vector.load %arg1[%c0, %c0_0] : memref<8x128xf32, #tpu.memory_space<vmem>>, vector<8x128xf32>
    %1 = arith.truncf %0 : vector<8x128xf32> to vector<8x128xbf16>
    %c0_1 = arith.constant 0 : index
    %c0_2 = arith.constant 0 : index
    %2 = vector.load %arg2[%c0_1, %c0_2] : memref<128x384xbf16, #tpu.memory_space<vmem>>, vector<128x384xbf16>
    %cst = arith.constant dense<0.000000e+00> : vector<8x384xf32>
    %3 = tpu.matmul %1, %2, %cst {dimension_numbers = #tpu.dot_dimension_numbers<[1], [0], [0], [1], [0, 0, 1, 1], [], []>} : vector<8x128xbf16>, vector<128x384xbf16>, vector<8x384xf32> -> vector<8x384xf32>
    %4 = arith.truncf %3 : vector<8x384xf32> to vector<8x384xbf16>
    %c0_3 = arith.constant 0 : index
    %c0_4 = arith.constant 0 : index
    %5 = vector.load %arg3[%c0_3, %c0_4] : memref<384x128xbf16, #tpu.memory_space<vmem>>, vector<384x128xbf16>
    %cst_5 = arith.constant dense<0.000000e+00> : vector<8x128xf32>
    %6 = tpu.matmul %4, %5, %cst_5 {dimension_numbers = #tpu.dot_dimension_numbers<[1], [0], [0], [1], [0, 0, 1, 1], [], []>} : vector<8x384xbf16>, vector<384x128xbf16>, vector<8x128xf32> -> vector<8x128xf32>
    %7 = tpu.iota {dimensions = array<i32: 1>} : vector<8x128xi32>
    %c15_i32 = arith.constant 15 : i32
    %8 = vector.broadcast %c15_i32 : i32 to vector<8x128xi32>
    %9 = arith.andi %7, %8 : vector<8x128xi32>
    %c10_i32 = arith.constant 10 : i32
    %10 = vector.broadcast %c10_i32 : i32 to vector<8x128xi32>
    %11 = arith.cmpi slt, %9, %10 : vector<8x128xi32>
    %cst_6 = arith.constant -1.000000e+30 : f32
    %12 = vector.broadcast %cst_6 : f32 to vector<8x128xf32>
    %13 = arith.select %11, %6, %12 : vector<8x128xi1>, vector<8x128xf32>
    %c120_i32 = arith.constant 120 : i32
    %14 = tpu.dynamic_rotate %13 by %c120_i32 dim 1 : vector<8x128xf32>, i32 -> vector<8x128xf32>
    %c8_i32 = arith.constant 8 : i32
    %15 = tpu.dynamic_rotate %13 by %c8_i32 dim 1 : vector<8x128xf32>, i32 -> vector<8x128xf32>
    %c8_i32_7 = arith.constant 8 : i32
    %16 = vector.broadcast %c8_i32_7 : i32 to vector<8x128xi32>
    %17 = arith.andi %7, %16 : vector<8x128xi32>
    %c0_i32 = arith.constant 0 : i32
    %18 = vector.broadcast %c0_i32 : i32 to vector<8x128xi32>
    %19 = arith.cmpi eq, %17, %18 : vector<8x128xi32>
    %20 = arith.select %19, %14, %15 : vector<8x128xi1>, vector<8x128xf32>
    %21 = arith.maximumf %13, %20 : vector<8x128xf32>
    %c124_i32 = arith.constant 124 : i32
    %22 = tpu.dynamic_rotate %21 by %c124_i32 dim 1 : vector<8x128xf32>, i32 -> vector<8x128xf32>
    %c4_i32 = arith.constant 4 : i32
    %23 = tpu.dynamic_rotate %21 by %c4_i32 dim 1 : vector<8x128xf32>, i32 -> vector<8x128xf32>
    %c4_i32_8 = arith.constant 4 : i32
    %24 = vector.broadcast %c4_i32_8 : i32 to vector<8x128xi32>
    %25 = arith.andi %7, %24 : vector<8x128xi32>
    %c0_i32_9 = arith.constant 0 : i32
    %26 = vector.broadcast %c0_i32_9 : i32 to vector<8x128xi32>
    %27 = arith.cmpi eq, %25, %26 : vector<8x128xi32>
    %28 = arith.select %27, %22, %23 : vector<8x128xi1>, vector<8x128xf32>
    %29 = arith.maximumf %21, %28 : vector<8x128xf32>
    %c126_i32 = arith.constant 126 : i32
    %30 = tpu.dynamic_rotate %29 by %c126_i32 dim 1 : vector<8x128xf32>, i32 -> vector<8x128xf32>
    %c2_i32 = arith.constant 2 : i32
    %31 = tpu.dynamic_rotate %29 by %c2_i32 dim 1 : vector<8x128xf32>, i32 -> vector<8x128xf32>
    %c2_i32_10 = arith.constant 2 : i32
    %32 = vector.broadcast %c2_i32_10 : i32 to vector<8x128xi32>
    %33 = arith.andi %7, %32 : vector<8x128xi32>
    %c0_i32_11 = arith.constant 0 : i32
    %34 = vector.broadcast %c0_i32_11 : i32 to vector<8x128xi32>
    %35 = arith.cmpi eq, %33, %34 : vector<8x128xi32>
    %36 = arith.select %35, %30, %31 : vector<8x128xi1>, vector<8x128xf32>
    %37 = arith.maximumf %29, %36 : vector<8x128xf32>
    %c127_i32 = arith.constant 127 : i32
    %38 = tpu.dynamic_rotate %37 by %c127_i32 dim 1 : vector<8x128xf32>, i32 -> vector<8x128xf32>
    %c1_i32 = arith.constant 1 : i32
    %39 = tpu.dynamic_rotate %37 by %c1_i32 dim 1 : vector<8x128xf32>, i32 -> vector<8x128xf32>
    %c1_i32_12 = arith.constant 1 : i32
    %40 = vector.broadcast %c1_i32_12 : i32 to vector<8x128xi32>
    %41 = arith.andi %7, %40 : vector<8x128xi32>
    %c0_i32_13 = arith.constant 0 : i32
    %42 = vector.broadcast %c0_i32_13 : i32 to vector<8x128xi32>
    %43 = arith.cmpi eq, %41, %42 : vector<8x128xi32>
    %44 = arith.select %43, %38, %39 : vector<8x128xi1>, vector<8x128xf32>
    %45 = arith.maximumf %37, %44 : vector<8x128xf32>
    %46 = arith.subf %13, %45 : vector<8x128xf32>
    %47 = math.exp %46 : vector<8x128xf32>
    %c120_i32_14 = arith.constant 120 : i32
    %48 = tpu.dynamic_rotate %47 by %c120_i32_14 dim 1 : vector<8x128xf32>, i32 -> vector<8x128xf32>
    %c8_i32_15 = arith.constant 8 : i32
    %49 = tpu.dynamic_rotate %47 by %c8_i32_15 dim 1 : vector<8x128xf32>, i32 -> vector<8x128xf32>
    %c8_i32_16 = arith.constant 8 : i32
    %50 = vector.broadcast %c8_i32_16 : i32 to vector<8x128xi32>
    %51 = arith.andi %7, %50 : vector<8x128xi32>
    %c0_i32_17 = arith.constant 0 : i32
    %52 = vector.broadcast %c0_i32_17 : i32 to vector<8x128xi32>
    %53 = arith.cmpi eq, %51, %52 : vector<8x128xi32>
    %54 = arith.select %53, %48, %49 : vector<8x128xi1>, vector<8x128xf32>
    %55 = arith.addf %47, %54 : vector<8x128xf32>
    %c124_i32_18 = arith.constant 124 : i32
    %56 = tpu.dynamic_rotate %55 by %c124_i32_18 dim 1 : vector<8x128xf32>, i32 -> vector<8x128xf32>
    %c4_i32_19 = arith.constant 4 : i32
    %57 = tpu.dynamic_rotate %55 by %c4_i32_19 dim 1 : vector<8x128xf32>, i32 -> vector<8x128xf32>
    %c4_i32_20 = arith.constant 4 : i32
    %58 = vector.broadcast %c4_i32_20 : i32 to vector<8x128xi32>
    %59 = arith.andi %7, %58 : vector<8x128xi32>
    %c0_i32_21 = arith.constant 0 : i32
    %60 = vector.broadcast %c0_i32_21 : i32 to vector<8x128xi32>
    %61 = arith.cmpi eq, %59, %60 : vector<8x128xi32>
    %62 = arith.select %61, %56, %57 : vector<8x128xi1>, vector<8x128xf32>
    %63 = arith.addf %55, %62 : vector<8x128xf32>
    %c126_i32_22 = arith.constant 126 : i32
    %64 = tpu.dynamic_rotate %63 by %c126_i32_22 dim 1 : vector<8x128xf32>, i32 -> vector<8x128xf32>
    %c2_i32_23 = arith.constant 2 : i32
    %65 = tpu.dynamic_rotate %63 by %c2_i32_23 dim 1 : vector<8x128xf32>, i32 -> vector<8x128xf32>
    %c2_i32_24 = arith.constant 2 : i32
    %66 = vector.broadcast %c2_i32_24 : i32 to vector<8x128xi32>
    %67 = arith.andi %7, %66 : vector<8x128xi32>
    %c0_i32_25 = arith.constant 0 : i32
    %68 = vector.broadcast %c0_i32_25 : i32 to vector<8x128xi32>
    %69 = arith.cmpi eq, %67, %68 : vector<8x128xi32>
    %70 = arith.select %69, %64, %65 : vector<8x128xi1>, vector<8x128xf32>
    %71 = arith.addf %63, %70 : vector<8x128xf32>
    %c127_i32_26 = arith.constant 127 : i32
    %72 = tpu.dynamic_rotate %71 by %c127_i32_26 dim 1 : vector<8x128xf32>, i32 -> vector<8x128xf32>
    %c1_i32_27 = arith.constant 1 : i32
    %73 = tpu.dynamic_rotate %71 by %c1_i32_27 dim 1 : vector<8x128xf32>, i32 -> vector<8x128xf32>
    %c1_i32_28 = arith.constant 1 : i32
    %74 = vector.broadcast %c1_i32_28 : i32 to vector<8x128xi32>
    %75 = arith.andi %7, %74 : vector<8x128xi32>
    %c0_i32_29 = arith.constant 0 : i32
    %76 = vector.broadcast %c0_i32_29 : i32 to vector<8x128xi32>
    %77 = arith.cmpi eq, %75, %76 : vector<8x128xi32>
    %78 = arith.select %77, %72, %73 : vector<8x128xi1>, vector<8x128xf32>
    %79 = arith.addf %71, %78 : vector<8x128xf32>
    %80 = tpu.reciprocal %79 {approx = true} : vector<8x128xf32> -> vector<8x128xf32>
    %81 = arith.mulf %47, %80 : vector<8x128xf32>
    %82 = arith.truncf %81 : vector<8x128xf32> to vector<8x128xbf16>
    %c0_30 = arith.constant 0 : index
    %c0_31 = arith.constant 0 : index
    %83 = vector.load %arg4[%c0_30, %c0_31] : memref<128x384xbf16, #tpu.memory_space<vmem>>, vector<128x384xbf16>
    %cst_32 = arith.constant dense<0.000000e+00> : vector<8x384xf32>
    %84 = tpu.matmul %82, %83, %cst_32 {dimension_numbers = #tpu.dot_dimension_numbers<[1], [0], [0], [1], [0, 0, 1, 1], [], []>} : vector<8x128xbf16>, vector<128x384xbf16>, vector<8x384xf32> -> vector<8x384xf32>
    %85 = arith.truncf %84 : vector<8x384xf32> to vector<8x384xbf16>
    %c0_33 = arith.constant 0 : index
    %c0_34 = arith.constant 0 : index
    %86 = vector.load %arg5[%c0_33, %c0_34] : memref<8x384xbf16, #tpu.memory_space<vmem>>, vector<8x384xbf16>
    tpu.vector_store %arg5[%c0_33, %c0_34], %85 {strides = array<i32>} : memref<8x384xbf16, #tpu.memory_space<vmem>>, vector<8x384xbf16>,
    return
  }
  func.func @transform_0(%arg0: i32) -> (i32, i32) {
    %c0_i32 = arith.constant 0 : i32
    %c0_i32_0 = arith.constant 0 : i32
    return %arg0, %c0_i32 : i32, i32
  }
  func.func @transform_1(%arg0: i32) -> (i32, i32) {
    %c0_i32 = arith.constant 0 : i32
    %c0_i32_0 = arith.constant 0 : i32
    %c0_i32_1 = arith.constant 0 : i32
    return %c0_i32, %c0_i32_0 : i32, i32
  }
  func.func @transform_2(%arg0: i32) -> (i32, i32) {
    %c0_i32 = arith.constant 0 : i32
    %c0_i32_0 = arith.constant 0 : i32
    %c0_i32_1 = arith.constant 0 : i32
    return %c0_i32, %c0_i32_0 : i32, i32
  }
  func.func @transform_3(%arg0: i32) -> (i32, i32) {
    %c0_i32 = arith.constant 0 : i32
    %c0_i32_0 = arith.constant 0 : i32
    %c0_i32_1 = arith.constant 0 : i32
    return %c0_i32, %c0_i32_0 : i32, i32
  }
  func.func @transform_4(%arg0: i32) -> (i32, i32) {
    %c0_i32 = arith.constant 0 : i32
    %c0_i32_0 = arith.constant 0 : i32
    return %arg0, %c0_i32 : i32, i32
  }
}

</mosaic_0001>

<llo_original>
// kernel: tpu_custom_call.1
$region0: #{tpu_custom_call.1}
  #allocation0 [shape = 'u32[]', space=smem, size = 0x4, offset = 0x4, fixed_abs, tag = 'smem constant byte address 0x4 - core index']
  #allocation1 [shape = 'u32[144,128]{1,0:T(1,128)}', space=vmem, size = 0x12000, scoped, tag = 'internal scratch']
  %s0 = inlined_call_operand.hbm [shape: f32[2,128], index: 0, kind: input, shape index: {}]
  %s1 = inlined_call_operand.hbm [shape: bf16[128,384], index: 1, kind: input, shape index: {}]
  %s2 = inlined_call_operand.hbm [shape: bf16[384,128], index: 2, kind: input, shape index: {}]
  %s3 = inlined_call_operand.hbm [shape: bf16[128,384], index: 3, kind: input, shape index: {}]
  %s4 = inlined_call_operand.hbm [shape: bf16[2,384], index: 4, kind: output, shape index: {}]
  %s5 = sld [smem:[#allocation0]]
  $region42: #{tpu_custom_call.1} parent=0
    _
  %s7 = ssub.s32 1, %s5
  %s8 = scalar_select 0, %s7, %s5
  $region1: #{tpu_custom_call.1} parent=0
    #allocation2 [shape = 'u8[4096]{0}', space=vmem, size = 0x1000, scoped, tag = 'input window, operand 0, single buffered']
    #allocation3 [shape = 's32[1]{0}', space=sflag, size = 0x4, scoped, tag = 'scoped memory for tpu_custom_call.1']
    #allocation4 [shape = 's32[1]{0}', space=sflag, size = 0x4, scoped, tag = 'scoped memory for tpu_custom_call.1']
    #allocation5 [shape = 'u8[98304]{0}', space=vmem, size = 0x18000, scoped, tag = 'input window, operand 1, single buffered']
    #allocation6 [shape = 's32[1]{0}', space=sflag, size = 0x4, scoped, tag = 'scoped memory for tpu_custom_call.1']
    #allocation7 [shape = 'u8[98304]{0}', space=vmem, size = 0x18000, scoped, tag = 'input window, operand 2, single buffered']
    #allocation8 [shape = 'u8[98304]{0}', space=vmem, size = 0x18000, scoped, tag = 'input window, operand 3, single buffered']
    #allocation9 [shape = 's32[1]{0}', space=sflag, size = 0x4, scoped, tag = 'scoped memory for tpu_custom_call.1']
    #allocation10 [shape = 'u8[6144]{0}', space=vmem, size = 0x1800, scoped, tag = 'output window, operand 0, single buffered']
    %9 = vsyncpa [#allocation3], 0
    %10 = vsyncpa [#allocation6], 0
    %11 = vsyncpa [#allocation9], 0
    %12 = vsyncpa [#allocation4], 0
    // Predicated region
    $region2: #{tpu_custom_call.1} parent=1 // pred_check
      _
    $region3: #{tpu_custom_call.1} parent=1 // pred_check_branch
      %14 = sbr.rel (0) target = $region5
    $region4: #{tpu_custom_call.1} parent=1 // pred_region
      %s16 = ssub.s32 128, 32
      %17 = vsyncadd [#allocation3], %s16
      %s18 = sshll.u32 [#allocation2], 4
      %s19 = int_to_ptr.vmem [resolvable:$true] %s18
      %24 = dma.hbm_to_vmem [thread:$0]  %s0, 32, %s19, [#allocation3], 32, 32, 2
    $region5: #{tpu_custom_call.1} parent=1 // pred_fallthru
      _
    // Predicated region
    $region6: #{tpu_custom_call.1} parent=1 // pred_check
      _
    $region7: #{tpu_custom_call.1} parent=1 // pred_check_branch
      %26 = sbr.rel (0) target = $region9
    $region8: #{tpu_custom_call.1} parent=1 // pred_region
      %s28 = ssub.s32 3072, 3072
      %29 = vsyncadd [#allocation6], %s28
      %s30 = sshll.u32 [#allocation5], 4
      %s31 = int_to_ptr.vmem [resolvable:$true] %s30
      %36 = dma.hbm_to_vmem [thread:$0]  %s1, 3072, %s31, [#allocation6], 192, 192, 12
    $region9: #{tpu_custom_call.1} parent=1 // pred_fallthru
      _
    // Predicated region
    $region10: #{tpu_custom_call.1} parent=1 // pred_check
      _
    $region11: #{tpu_custom_call.1} parent=1 // pred_check_branch
      %38 = sbr.rel (0) target = $region13
    $region12: #{tpu_custom_call.1} parent=1 // pred_region
      %s40 = ssub.s32 3072, 3072
      %41 = vsyncadd [#allocation6], %s40
      %s42 = sshll.u32 [#allocation7], 4
      %s43 = int_to_ptr.vmem [resolvable:$true] %s42
      %48 = dma.hbm_to_vmem [thread:$0]  %s2, 3072, %s43, [#allocation6], 64, 64, 4
    $region13: #{tpu_custom_call.1} parent=1 // pred_fallthru
      _
    // Predicated region
    $region14: #{tpu_custom_call.1} parent=1 // pred_check
      _
    $region15: #{tpu_custom_call.1} parent=1 // pred_check_branch
      %50 = sbr.rel (0) target = $region17
    $region16: #{tpu_custom_call.1} parent=1 // pred_region
      %s52 = ssub.s32 3072, 3072
      %53 = vsyncadd [#allocation9], %s52
      %s54 = sshll.u32 [#allocation8], 4
      %s55 = int_to_ptr.vmem [resolvable:$true] %s54
      %60 = dma.hbm_to_vmem [thread:$0]  %s3, 3072, %s55, [#allocation9], 192, 192, 12
    $region17: #{tpu_custom_call.1} parent=1 // pred_fallthru
      _
    // Predicated region
    $region18: #{tpu_custom_call.1} parent=1 // pred_check
      _
    $region19: #{tpu_custom_call.1} parent=1 // pred_check_branch
      %62 = sbr.rel (0) target = $region21
    $region20: #{tpu_custom_call.1} parent=1 // pred_region
      %63 = dma.done [#allocation3], 128
    $region21: #{tpu_custom_call.1} parent=1 // pred_fallthru
      _
    // Predicated region
    $region22: #{tpu_custom_call.1} parent=1 // pred_check
      _
    $region23: #{tpu_custom_call.1} parent=1 // pred_check_branch
      %65 = sbr.rel (0) target = $region25
    $region24: #{tpu_custom_call.1} parent=1 // pred_region
      %66 = dma.done [#allocation6], 3072
    $region25: #{tpu_custom_call.1} parent=1 // pred_fallthru
      _
    // Predicated region
    $region26: #{tpu_custom_call.1} parent=1 // pred_check
      _
    $region27: #{tpu_custom_call.1} parent=1 // pred_check_branch
      %68 = sbr.rel (0) target = $region29
    $region28: #{tpu_custom_call.1} parent=1 // pred_region
      %69 = dma.done [#allocation6], 3072
    $region29: #{tpu_custom_call.1} parent=1 // pred_fallthru
      _
    // Predicated region
    $region30: #{tpu_custom_call.1} parent=1 // pred_check
      _
    $region31: #{tpu_custom_call.1} parent=1 // pred_check_branch
      %71 = sbr.rel (0) target = $region33
    $region32: #{tpu_custom_call.1} parent=1 // pred_region
      %72 = dma.done [#allocation9], 3072
    $region33: #{tpu_custom_call.1} parent=1 // pred_fallthru
      _
    %v74 = vld [vmem:[#allocation2] sm:$0xff]
    %v75 = vpack.c.bf16 %v74, %v74
    %v76 = vld [vmem:[#allocation5] sm:$0xff]
    %v77 = vld [vmem:[#allocation5 + $0x8] sm:$0xf]
    %v78 = vld [vmem:[#allocation5 + $0xc] sm:$0xff]
    %v79 = vld [vmem:[#allocation5 + $0x14] sm:$0xf]
    %v80 = vld [vmem:[#allocation5 + $0x18] sm:$0xff]
    %v81 = vld [vmem:[#allocation5 + $0x20] sm:$0xf]
    %v82 = vld [vmem:[#allocation5 + $0x24] sm:$0xff]
    %v83 = vld [vmem:[#allocation5 + $0x2c] sm:$0xf]
    %v84 = vld [vmem:[#allocation5 + $0x30] sm:$0xff]
    %v85 = vld [vmem:[#allocation5 + $0x38] sm:$0xf]
    %v86 = vld [vmem:[#allocation5 + $0x3c] sm:$0xff]
    %v87 = vld [vmem:[#allocation5 + $0x44] sm:$0xf]
    %v88 = vld [vmem:[#allocation5 + $0x48] sm:$0xff]
    %v89 = vld [vmem:[#allocation5 + $0x50] sm:$0xf]
    %v90 = vld [vmem:[#allocation5 + $0x54] sm:$0xff]
    %v91 = vld [vmem:[#allocation5 + $0x5c] sm:$0xf]
    %v92 = vld [vmem:[#allocation5 + $0x60] sm:$0xff]
    %v93 = vld [vmem:[#allocation5 + $0x68] sm:$0xf]
    %v94 = vld [vmem:[#allocation5 + $0x6c] sm:$0xff]
    %v95 = vld [vmem:[#allocation5 + $0x74] sm:$0xf]
    %v96 = vld [vmem:[#allocation5 + $0x78] sm:$0xff]
    %v97 = vld [vmem:[#allocation5 + $0x80] sm:$0xf]
    %v98 = vld [vmem:[#allocation5 + $0x84] sm:$0xff]
    %v99 = vld [vmem:[#allocation5 + $0x8c] sm:$0xf]
    %v100 = vld [vmem:[#allocation5 + $0x90] sm:$0xff]
    %v101 = vld [vmem:[#allocation5 + $0x98] sm:$0xf]
    %v102 = vld [vmem:[#allocation5 + $0x9c] sm:$0xff]
    %v103 = vld [vmem:[#allocation5 + $0xa4] sm:$0xf]
    %v104 = vld [vmem:[#allocation5 + $0xa8] sm:$0xff]
    %v105 = vld [vmem:[#allocation5 + $0xb0] sm:$0xf]
    %v106 = vld [vmem:[#allocation5 + $0xb4] sm:$0xff]
    %v107 = vld [vmem:[#allocation5 + $0xbc] sm:$0xf]
    %v140 = vunpack.c.l.b16 %v76
    %v141 = vunpack.c.h.b16 %v76
    %v142 = vunpack.c.l.b16 %v77
    %v143 = vunpack.c.l.b16 %v78
    %v144 = vunpack.c.h.b16 %v78
    %v145 = vunpack.c.l.b16 %v79
    %v146 = vunpack.c.l.b16 %v80
    %v147 = vunpack.c.h.b16 %v80
    %v148 = vunpack.c.l.b16 %v81
    %v149 = vunpack.c.l.b16 %v82
    %v150 = vunpack.c.h.b16 %v82
    %v151 = vunpack.c.l.b16 %v83
    %v152 = vunpack.c.l.b16 %v84
    %v153 = vunpack.c.h.b16 %v84
    %v154 = vunpack.c.l.b16 %v85
    %v155 = vunpack.c.l.b16 %v86
    %v156 = vunpack.c.h.b16 %v86
    %v157 = vunpack.c.l.b16 %v87
    %v158 = vunpack.c.l.b16 %v88
    %v159 = vunpack.c.h.b16 %v88
    %v160 = vunpack.c.l.b16 %v89
    %v161 = vunpack.c.l.b16 %v90
    %v162 = vunpack.c.h.b16 %v90
    %v163 = vunpack.c.l.b16 %v91
    %v164 = vunpack.c.l.b16 %v92
    %v165 = vunpack.c.h.b16 %v92
    %v166 = vunpack.c.l.b16 %v93
    %v167 = vunpack.c.l.b16 %v94
    %v168 = vunpack.c.h.b16 %v94
    %v169 = vunpack.c.l.b16 %v95
    %v170 = vunpack.c.l.b16 %v96
    %v171 = vunpack.c.h.b16 %v96
    %v172 = vunpack.c.l.b16 %v97
    %v173 = vunpack.c.l.b16 %v98
    %v174 = vunpack.c.h.b16 %v98
    %v175 = vunpack.c.l.b16 %v99
    %v176 = vunpack.c.l.b16 %v100
    %v177 = vunpack.c.h.b16 %v100
    %v178 = vunpack.c.l.b16 %v101
    %v179 = vunpack.c.l.b16 %v102
    %v180 = vunpack.c.h.b16 %v102
    %v181 = vunpack.c.l.b16 %v103
    %v182 = vunpack.c.l.b16 %v104
    %v183 = vunpack.c.h.b16 %v104
    %v184 = vunpack.c.l.b16 %v105
    %v185 = vunpack.c.l.b16 %v106
    %v186 = vunpack.c.h.b16 %v106
    %v187 = vunpack.c.l.b16 %v107
    %v188 = vpack.c.b16 %v143, %v140
    %v189 = vpack.c.b16 %v144, %v141
    %v190 = vpack.c.b16 %v145, %v142
    %v191 = vpack.c.b16 %v149, %v146
    %v192 = vpack.c.b16 %v150, %v147
    %v193 = vpack.c.b16 %v151, %v148
    %v194 = vpack.c.b16 %v155, %v152
    %v195 = vpack.c.b16 %v156, %v153
    %v196 = vpack.c.b16 %v157, %v154
    %v197 = vpack.c.b16 %v161, %v158
    %v198 = vpack.c.b16 %v162, %v159
    %v199 = vpack.c.b16 %v163, %v160
    %v200 = vpack.c.b16 %v167, %v164
    %v201 = vpack.c.b16 %v168, %v165
    %v202 = vpack.c.b16 %v169, %v166
    %v203 = vpack.c.b16 %v173, %v170
    %v204 = vpack.c.b16 %v174, %v171
    %v205 = vpack.c.b16 %v175, %v172
    %v206 = vpack.c.b16 %v179, %v176
    %v207 = vpack.c.b16 %v180, %v177
    %v208 = vpack.c.b16 %v181, %v178
    %v209 = vpack.c.b16 %v185, %v182
    %v210 = vpack.c.b16 %v186, %v183
    %v211 = vpack.c.b16 %v187, %v184
    %236 = vmatprep.subr.bf16.mxu0 %v189
    %237 = vmatpush1.bf16.msra.mxu0 %v188
    %238 = vmatprep.subr.bf16.mxu0 %v192
    %239 = vmatpush1.bf16.msra.mxu0 %v191
    %240 = vmatprep.subr.bf16.mxu0 %v195
    %241 = vmatpush1.bf16.msra.mxu0 %v194
    %242 = vmatprep.subr.bf16.mxu0 %v198
    %243 = vmatpush1.bf16.msra.mxu0 %v197
    %244 = vmatprep.subr.bf16.mxu0 %v201
    %245 = vmatpush1.bf16.msra.mxu0 %v200
    %246 = vmatprep.subr.bf16.mxu0 %v204
    %247 = vmatpush1.bf16.msra.mxu0 %v203
    %248 = vmatprep.subr.bf16.mxu0 %v207
    %249 = vmatpush1.bf16.msra.mxu0 %v206
    %250 = vmatprep.subr.bf16.mxu0 %v210
    %251 = vmatpush1.bf16.msra.mxu0 %v209
    %252 = vmatprep.subr.bf16.mxu0 0
    %253 = vmatpush1.bf16.msra.mxu0 0
    %254 = vmatprep.subr.bf16.mxu0 0
    %255 = vmatpush1.bf16.msra.mxu0 0
    %256 = vmatprep.subr.bf16.mxu0 0
    %257 = vmatpush1.bf16.msra.mxu0 0
    %258 = vmatprep.subr.bf16.mxu0 0
    %259 = vmatpush1.bf16.msra.mxu0 0
    %260 = vmatprep.subr.bf16.mxu0 0
    %261 = vmatpush1.bf16.msra.mxu0 0
    %262 = vmatprep.subr.bf16.mxu0 0
    %263 = vmatpush1.bf16.msra.mxu0 0
    %264 = vmatprep.subr.bf16.mxu0 0
    %265 = vmatpush1.bf16.msra.mxu0 0
    %266 = vmatprep.subr.bf16.mxu0 0
    %267 = vmatpush1.bf16.msra.mxu0 0
    %268 = vmatprep.mubr.bf16.mxu0 0
    %269 = vmatmul.mubr.bf16.gmra.mrb[0].mxu0 %v75
    %v270 = vpop.f32.mrb[0].mxu0
    %v271 = vadd.f32 0.0, %v270
    %v272 = vpop.f32.mrb[0].mxu0
    %v273 = vadd.f32 0.0, %v272
    %v274 = vpop.f32.mrb[0].mxu0
    %v275 = vpop.f32.mrb[0].mxu0
    %276 = vdwg.mxu0
    %277 = vmatprep.subr.bf16.mxu0 0
    %278 = vmatpush1.bf16.msra.mxu0 %v190
    %279 = vmatprep.subr.bf16.mxu0 0
    %280 = vmatpush1.bf16.msra.mxu0 %v193
    %281 = vmatprep.subr.bf16.mxu0 0
    %282 = vmatpush1.bf16.msra.mxu0 %v196
    %283 = vmatprep.subr.bf16.mxu0 0
    %284 = vmatpush1.bf16.msra.mxu0 %v199
    %285 = vmatprep.subr.bf16.mxu0 0
    %286 = vmatpush1.bf16.msra.mxu0 %v202
    %287 = vmatprep.subr.bf16.mxu0 0
    %288 = vmatpush1.bf16.msra.mxu0 %v205
    %289 = vmatprep.subr.bf16.mxu0 0
    %290 = vmatpush1.bf16.msra.mxu0 %v208
    %291 = vmatprep.subr.bf16.mxu0 0
    %292 = vmatpush1.bf16.msra.mxu0 %v211
    %293 = vmatprep.subr.bf16.mxu0 0
    %294 = vmatpush1.bf16.msra.mxu0 0
    %295 = vmatprep.subr.bf16.mxu0 0
    %296 = vmatpush1.bf16.msra.mxu0 0
    %297 = vmatprep.subr.bf16.mxu0 0
    %298 = vmatpush1.bf16.msra.mxu0 0
    %299 = vmatprep.subr.bf16.mxu0 0
    %300 = vmatpush1.bf16.msra.mxu0 0
    %301 = vmatprep.subr.bf16.mxu0 0
    %302 = vmatpush1.bf16.msra.mxu0 0
    %303 = vmatprep.subr.bf16.mxu0 0
    %304 = vmatpush1.bf16.msra.mxu0 0
    %305 = vmatprep.subr.bf16.mxu0 0
    %306 = vmatpush1.bf16.msra.mxu0 0
    %307 = vmatprep.subr.bf16.mxu0 0
    %308 = vmatpush1.bf16.msra.mxu0 0
    %309 = vmatprep.mubr.bf16.mxu0 0
    %310 = vmatmul.mubr.bf16.gmra.mrb[0].mxu0 %v75
    %v311 = vpop.f32.mrb[0].mxu0
    %v312 = vadd.f32 0.0, %v311
    %v313 = vpop.f32.mrb[0].mxu0
    %v314 = vpop.f32.mrb[0].mxu0
    %v315 = vpop.f32.mrb[0].mxu0
    %316 = vdwg.mxu0
    %v317 = vpack.c.bf16 %v271, %v271
    %v318 = vpack.c.bf16 %v273, %v273
    %v319 = vpack.c.bf16 %v312, %v312
    %v320 = vld [vmem:[#allocation7] sm:$0xf]
    %v321 = vld [vmem:[#allocation7 + $0x4] sm:$0xf]
    %v322 = vld [vmem:[#allocation7 + $0x8] sm:$0xf]
    %v323 = vld [vmem:[#allocation7 + $0xc] sm:$0xf]
    %v324 = vld [vmem:[#allocation7 + $0x10] sm:$0xf]
    %v325 = vld [vmem:[#allocation7 + $0x14] sm:$0xf]
    %v326 = vld [vmem:[#allocation7 + $0x18] sm:$0xf]
    %v327 = vld [vmem:[#allocation7 + $0x1c] sm:$0xf]
    %v328 = vld [vmem:[#allocation7 + $0x20] sm:$0xf]
    %v329 = vld [vmem:[#allocation7 + $0x24] sm:$0xf]
    %v330 = vld [vmem:[#allocation7 + $0x28] sm:$0xf]
    %v331 = vld [vmem:[#allocation7 + $0x2c] sm:$0xf]
    %v332 = vld [vmem:[#allocation7 + $0x30] sm:$0xf]
    %v333 = vld [vmem:[#allocation7 + $0x34] sm:$0xf]
    %v334 = vld [vmem:[#allocation7 + $0x38] sm:$0xf]
    %v335 = vld [vmem:[#allocation7 + $0x3c] sm:$0xf]
    %v336 = vld [vmem:[#allocation7 + $0x40] sm:$0xf]
    %v337 = vld [vmem:[#allocation7 + $0x44] sm:$0xf]
    %v338 = vld [vmem:[#allocation7 + $0x48] sm:$0xf]
    %v339 = vld [vmem:[#allocation7 + $0x4c] sm:$0xf]
    %v340 = vld [vmem:[#allocation7 + $0x50] sm:$0xf]
    %v341 = vld [vmem:[#allocation7 + $0x54] sm:$0xf]
    %v342 = vld [vmem:[#allocation7 + $0x58] sm:$0xf]
    %v343 = vld [vmem:[#allocation7 + $0x5c] sm:$0xf]
    %v344 = vld [vmem:[#allocation7 + $0x60] sm:$0xf]
    %v345 = vld [vmem:[#allocation7 + $0x64] sm:$0xf]
    %v346 = vld [vmem:[#allocation7 + $0x68] sm:$0xf]
    %v347 = vld [vmem:[#allocation7 + $0x6c] sm:$0xf]
    %v348 = vld [vmem:[#allocation7 + $0x70] sm:$0xf]
    %v349 = vld [vmem:[#allocation7 + $0x74] sm:$0xf]
    %v350 = vld [vmem:[#allocation7 + $0x78] sm:$0xf]
    %v351 = vld [vmem:[#allocation7 + $0x7c] sm:$0xf]
    %v352 = vld [vmem:[#allocation7 + $0x80] sm:$0xf]
    %v353 = vld [vmem:[#allocation7 + $0x84] sm:$0xf]
    %v354 = vld [vmem:[#allocation7 + $0x88] sm:$0xf]
    %v355 = vld [vmem:[#allocation7 + $0x8c] sm:$0xf]
    %v356 = vld [vmem:[#allocation7 + $0x90] sm:$0xf]
    %v357 = vld [vmem:[#allocation7 + $0x94] sm:$0xf]
    %v358 = vld [vmem:[#allocation7 + $0x98] sm:$0xf]
    %v359 = vld [vmem:[#allocation7 + $0x9c] sm:$0xf]
    %v360 = vld [vmem:[#allocation7 + $0xa0] sm:$0xf]
    %v361 = vld [vmem:[#allocation7 + $0xa4] sm:$0xf]
    %v362 = vld [vmem:[#allocation7 + $0xa8] sm:$0xf]
    %v363 = vld [vmem:[#allocation7 + $0xac] sm:$0xf]
    %v364 = vld [vmem:[#allocation7 + $0xb0] sm:$0xf]
    %v365 = vld [vmem:[#allocation7 + $0xb4] sm:$0xf]
    %v366 = vld [vmem:[#allocation7 + $0xb8] sm:$0xf]
    %v367 = vld [vmem:[#allocation7 + $0xbc] sm:$0xf]
    %v416 = vunpack.c.l.b16 %v320
    %v417 = vunpack.c.l.b16 %v321
    %v418 = vunpack.c.l.b16 %v322
    %v419 = vunpack.c.l.b16 %v323
    %v420 = vunpack.c.l.b16 %v324
    %v421 = vunpack.c.l.b16 %v325
    %v422 = vunpack.c.l.b16 %v326
    %v423 = vunpack.c.l.b16 %v327
    %v424 = vunpack.c.l.b16 %v328
    %v425 = vunpack.c.l.b16 %v329
    %v426 = vunpack.c.l.b16 %v330
    %v427 = vunpack.c.l.b16 %v331
    %v428 = vunpack.c.l.b16 %v332
    %v429 = vunpack.c.l.b16 %v333
    %v430 = vunpack.c.l.b16 %v334
    %v431 = vunpack.c.l.b16 %v335
    %v432 = vunpack.c.l.b16 %v336
    %v433 = vunpack.c.l.b16 %v337
    %v434 = vunpack.c.l.b16 %v338
    %v435 = vunpack.c.l.b16 %v339
    %v436 = vunpack.c.l.b16 %v340
    %v437 = vunpack.c.l.b16 %v341
    %v438 = vunpack.c.l.b16 %v342
    %v439 = vunpack.c.l.b16 %v343
    %v440 = vunpack.c.l.b16 %v344
    %v441 = vunpack.c.l.b16 %v345
    %v442 = vunpack.c.l.b16 %v346
    %v443 = vunpack.c.l.b16 %v347
    %v444 = vunpack.c.l.b16 %v348
    %v445 = vunpack.c.l.b16 %v349
    %v446 = vunpack.c.l.b16 %v350
    %v447 = vunpack.c.l.b16 %v351
    %v448 = vunpack.c.l.b16 %v352
    %v449 = vunpack.c.l.b16 %v353
    %v450 = vunpack.c.l.b16 %v354
    %v451 = vunpack.c.l.b16 %v355
    %v452 = vunpack.c.l.b16 %v356
    %v453 = vunpack.c.l.b16 %v357
    %v454 = vunpack.c.l.b16 %v358
    %v455 = vunpack.c.l.b16 %v359
    %v456 = vunpack.c.l.b16 %v360
    %v457 = vunpack.c.l.b16 %v361
    %v458 = vunpack.c.l.b16 %v362
    %v459 = vunpack.c.l.b16 %v363
    %v460 = vunpack.c.l.b16 %v364
    %v461 = vunpack.c.l.b16 %v365
    %v462 = vunpack.c.l.b16 %v366
    %v463 = vunpack.c.l.b16 %v367
    %v464 = vpack.c.b16 %v417, %v416
    %v465 = vpack.c.b16 %v419, %v418
    %v466 = vpack.c.b16 %v421, %v420
    %v467 = vpack.c.b16 %v423, %v422
    %v468 = vpack.c.b16 %v425, %v424
    %v469 = vpack.c.b16 %v427, %v426
    %v470 = vpack.c.b16 %v429, %v428
    %v471 = vpack.c.b16 %v431, %v430
    %v472 = vpack.c.b16 %v433, %v432
    %v473 = vpack.c.b16 %v435, %v434
    %v474 = vpack.c.b16 %v437, %v436
    %v475 = vpack.c.b16 %v439, %v438
    %v476 = vpack.c.b16 %v441, %v440
    %v477 = vpack.c.b16 %v443, %v442
    %v478 = vpack.c.b16 %v445, %v444
    %v479 = vpack.c.b16 %v447, %v446
    %v480 = vpack.c.b16 %v449, %v448
    %v481 = vpack.c.b16 %v451, %v450
    %v482 = vpack.c.b16 %v453, %v452
    %v483 = vpack.c.b16 %v455, %v454
    %v484 = vpack.c.b16 %v457, %v456
    %v485 = vpack.c.b16 %v459, %v458
    %v486 = vpack.c.b16 %v461, %v460
    %v487 = vpack.c.b16 %v463, %v462
    %512 = vmatprep.subr.bf16.mxu0 0
    %513 = vmatpush1.bf16.msra.mxu0 %v464
    %514 = vmatprep.subr.bf16.mxu0 0
    %515 = vmatpush1.bf16.msra.mxu0 %v465
    %516 = vmatprep.subr.bf16.mxu0 0
    %517 = vmatpush1.bf16.msra.mxu0 %v466
    %518 = vmatprep.subr.bf16.mxu0 0
    %519 = vmatpush1.bf16.msra.mxu0 %v467
    %520 = vmatprep.subr.bf16.mxu0 0
    %521 = vmatpush1.bf16.msra.mxu0 %v468
    %522 = vmatprep.subr.bf16.mxu0 0
    %523 = vmatpush1.bf16.msra.mxu0 %v469
    %524 = vmatprep.subr.bf16.mxu0 0
    %525 = vmatpush1.bf16.msra.mxu0 %v470
    %526 = vmatprep.subr.bf16.mxu0 0
    %527 = vmatpush1.bf16.msra.mxu0 %v471
    %528 = vmatprep.subr.bf16.mxu0 0
    %529 = vmatpush1.bf16.msra.mxu0 %v472
    %530 = vmatprep.subr.bf16.mxu0 0
    %531 = vmatpush1.bf16.msra.mxu0 %v473
    %532 = vmatprep.subr.bf16.mxu0 0
    %533 = vmatpush1.bf16.msra.mxu0 %v474
    %534 = vmatprep.subr.bf16.mxu0 0
    %535 = vmatpush1.bf16.msra.mxu0 %v475
    %536 = vmatprep.subr.bf16.mxu0 0
    %537 = vmatpush1.bf16.msra.mxu0 %v476
    %538 = vmatprep.subr.bf16.mxu0 0
    %539 = vmatpush1.bf16.msra.mxu0 %v477
    %540 = vmatprep.subr.bf16.mxu0 0
    %541 = vmatpush1.bf16.msra.mxu0 %v478
    %542 = vmatprep.subr.bf16.mxu0 0
    %543 = vmatpush1.bf16.msra.mxu0 %v479
    %544 = vmatprep.mubr.bf16.mxu0 %v318
    %545 = vmatmul.mubr.bf16.gmra.mrb[0].mxu0 %v317
    %v546 = vpop.f32.mrb[0].mxu0
    %v547 = vadd.f32 0.0, %v546
    %v548 = vpop.f32.mrb[0].mxu0
    %v549 = vpop.f32.mrb[0].mxu0
    %v550 = vpop.f32.mrb[0].mxu0
    %551 = vdwg.mxu0
    %552 = vmatprep.subr.bf16.mxu0 0
    %553 = vmatpush1.bf16.msra.mxu0 %v480
    %554 = vmatprep.subr.bf16.mxu0 0
    %555 = vmatpush1.bf16.msra.mxu0 %v481
    %556 = vmatprep.subr.bf16.mxu0 0
    %557 = vmatpush1.bf16.msra.mxu0 %v482
    %558 = vmatprep.subr.bf16.mxu0 0
    %559 = vmatpush1.bf16.msra.mxu0 %v483
    %560 = vmatprep.subr.bf16.mxu0 0
    %561 = vmatpush1.bf16.msra.mxu0 %v484
    %562 = vmatprep.subr.bf16.mxu0 0
    %563 = vmatpush1.bf16.msra.mxu0 %v485
    %564 = vmatprep.subr.bf16.mxu0 0
    %565 = vmatpush1.bf16.msra.mxu0 %v486
    %566 = vmatprep.subr.bf16.mxu0 0
    %567 = vmatpush1.bf16.msra.mxu0 %v487
    %568 = vmatprep.subr.bf16.mxu0 0
    %569 = vmatpush1.bf16.msra.mxu0 0
    %570 = vmatprep.subr.bf16.mxu0 0
    %571 = vmatpush1.bf16.msra.mxu0 0
    %572 = vmatprep.subr.bf16.mxu0 0
    %573 = vmatpush1.bf16.msra.mxu0 0
    %574 = vmatprep.subr.bf16.mxu0 0
    %575 = vmatpush1.bf16.msra.mxu0 0
    %576 = vmatprep.subr.bf16.mxu0 0
    %577 = vmatpush1.bf16.msra.mxu0 0
    %578 = vmatprep.subr.bf16.mxu0 0
    %579 = vmatpush1.bf16.msra.mxu0 0
    %580 = vmatprep.subr.bf16.mxu0 0
    %581 = vmatpush1.bf16.msra.mxu0 0
    %582 = vmatprep.subr.bf16.mxu0 0
    %583 = vmatpush1.bf16.msra.mxu0 0
    %584 = vmatprep.mubr.bf16.mxu0 0
    %585 = vmatmul.mubr.bf16.gmra.mrb[0].mxu0 %v319
    %v586 = vpop.f32.mrb[0].mxu0
    %v587 = vadd.f32 %v547, %v586
    %v588 = vpop.f32.mrb[0].mxu0
    %v589 = vpop.f32.mrb[0].mxu0
    %v590 = vpop.f32.mrb[0].mxu0
    %591 = vdwg.mxu0
    %v592 = vlaneseq
    %v593 = vand.u32 %v592, 127
    %v594 = vand.u32 %v593, 15
    %vm595 = vcmp.lt.s32.totalorder %v594, 10
    %v596 = vsel %vm595, %v587, -1e+30
    %597 = vrot.lane.b32.xlu0 %v596, 120
    %v598 = vpop.permute.xlu0 %597
    %599 = vrot.lane.b32.xlu0 %v596, 8
    %v600 = vpop.permute.xlu0 %599
    %v601 = vand.u32 %v593, 8
    %vm602 = vcmp.eq.s32.totalorder %v601, 0
    %v603 = vsel %vm602, %v598, %v600
    %v604 = vmax.f32 %v596, %v603
    %605 = vrot.lane.b32.xlu0 %v604, 124
    %v606 = vpop.permute.xlu0 %605
    %607 = vrot.lane.b32.xlu0 %v604, 4
    %v608 = vpop.permute.xlu0 %607
    %v609 = vand.u32 %v593, 4
    %vm610 = vcmp.eq.s32.totalorder %v609, 0
    %v611 = vsel %vm610, %v606, %v608
    %v612 = vmax.f32 %v604, %v611
    %613 = vrot.lane.b32.xlu0 %v612, 126
    %v614 = vpop.permute.xlu0 %613
    %615 = vrot.lane.b32.xlu0 %v612, 2
    %v616 = vpop.permute.xlu0 %615
    %v617 = vand.u32 %v593, 2
    %vm618 = vcmp.eq.s32.totalorder %v617, 0
    %v619 = vsel %vm618, %v614, %v616
    %v620 = vmax.f32 %v612, %v619
    %621 = vrot.lane.b32.xlu0 %v620, 127
    %v622 = vpop.permute.xlu0 %621
    %623 = vrot.lane.b32.xlu0 %v620, 1
    %v624 = vpop.permute.xlu0 %623
    %v625 = vand.u32 %v593, 1
    %vm626 = vcmp.eq.s32.totalorder %v625, 0
    %v627 = vsel %vm626, %v622, %v624
    %v628 = vmax.f32 %v620, %v627
    %v629 = vsub.f32 %v596, %v628
    %v630 = vmul.f32 %v629, 1.442695
    %v631 = vpow.pop %v630
    %632 = vrot.lane.b32.xlu0 %v631, 120
    %v633 = vpop.permute.xlu0 %632
    %634 = vrot.lane.b32.xlu0 %v631, 8
    %v635 = vpop.permute.xlu0 %634
    %v636 = vsel %vm602, %v633, %v635
    %v637 = vadd.f32 %v631, %v636
    %638 = vrot.lane.b32.xlu0 %v637, 124
    %v639 = vpop.permute.xlu0 %638
    %640 = vrot.lane.b32.xlu0 %v637, 4
    %v641 = vpop.permute.xlu0 %640
    %v642 = vsel %vm610, %v639, %v641
    %v643 = vadd.f32 %v637, %v642
    %644 = vrot.lane.b32.xlu0 %v643, 126
    %v645 = vpop.permute.xlu0 %644
    %646 = vrot.lane.b32.xlu0 %v643, 2
    %v647 = vpop.permute.xlu0 %646
    %v648 = vsel %vm618, %v645, %v647
    %v649 = vadd.f32 %v643, %v648
    %650 = vrot.lane.b32.xlu0 %v649, 127
    %v651 = vpop.permute.xlu0 %650
    %652 = vrot.lane.b32.xlu0 %v649, 1
    %v653 = vpop.permute.xlu0 %652
    %v654 = vsel %vm626, %v651, %v653
    %v655 = vadd.f32 %v649, %v654
    %v656 = vrcp.pop %v655
    %v657 = vmul.f32 %v631, %v656
    %v658 = vpack.c.bf16 %v657, %v657
    %v659 = vld [vmem:[#allocation8] sm:$0xff]
    %v660 = vld [vmem:[#allocation8 + $0x8] sm:$0xf]
    %v661 = vld [vmem:[#allocation8 + $0xc] sm:$0xff]
    %v662 = vld [vmem:[#allocation8 + $0x14] sm:$0xf]
    %v663 = vld [vmem:[#allocation8 + $0x18] sm:$0xff]
    %v664 = vld [vmem:[#allocation8 + $0x20] sm:$0xf]
    %v665 = vld [vmem:[#allocation8 + $0x24] sm:$0xff]
    %v666 = vld [vmem:[#allocation8 + $0x2c] sm:$0xf]
    %v667 = vld [vmem:[#allocation8 + $0x30] sm:$0xff]
    %v668 = vld [vmem:[#allocation8 + $0x38] sm:$0xf]
    %v669 = vld [vmem:[#allocation8 + $0x3c] sm:$0xff]
    %v670 = vld [vmem:[#allocation8 + $0x44] sm:$0xf]
    %v671 = vld [vmem:[#allocation8 + $0x48] sm:$0xff]
    %v672 = vld [vmem:[#allocation8 + $0x50] sm:$0xf]
    %v673 = vld [vmem:[#allocation8 + $0x54] sm:$0xff]
    %v674 = vld [vmem:[#allocation8 + $0x5c] sm:$0xf]
    %v675 = vld [vmem:[#allocation8 + $0x60] sm:$0xff]
    %v676 = vld [vmem:[#allocation8 + $0x68] sm:$0xf]
    %v677 = vld [vmem:[#allocation8 + $0x6c] sm:$0xff]
    %v678 = vld [vmem:[#allocation8 + $0x74] sm:$0xf]
    %v679 = vld [vmem:[#allocation8 + $0x78] sm:$0xff]
    %v680 = vld [vmem:[#allocation8 + $0x80] sm:$0xf]
    %v681 = vld [vmem:[#allocation8 + $0x84] sm:$0xff]
    %v682 = vld [vmem:[#allocation8 + $0x8c] sm:$0xf]
    %v683 = vld [vmem:[#allocation8 + $0x90] sm:$0xff]
    %v684 = vld [vmem:[#allocation8 + $0x98] sm:$0xf]
    %v685 = vld [vmem:[#allocation8 + $0x9c] sm:$0xff]
    %v686 = vld [vmem:[#allocation8 + $0xa4] sm:$0xf]
    %v687 = vld [vmem:[#allocation8 + $0xa8] sm:$0xff]
    %v688 = vld [vmem:[#allocation8 + $0xb0] sm:$0xf]
    %v689 = vld [vmem:[#allocation8 + $0xb4] sm:$0xff]
    %v690 = vld [vmem:[#allocation8 + $0xbc] sm:$0xf]
    %v723 = vunpack.c.l.b16 %v659
    %v724 = vunpack.c.h.b16 %v659
    %v725 = vunpack.c.l.b16 %v660
    %v726 = vunpack.c.l.b16 %v661
    %v727 = vunpack.c.h.b16 %v661
    %v728 = vunpack.c.l.b16 %v662
    %v729 = vunpack.c.l.b16 %v663
    %v730 = vunpack.c.h.b16 %v663
    %v731 = vunpack.c.l.b16 %v664
    %v732 = vunpack.c.l.b16 %v665
    %v733 = vunpack.c.h.b16 %v665
    %v734 = vunpack.c.l.b16 %v666
    %v735 = vunpack.c.l.b16 %v667
    %v736 = vunpack.c.h.b16 %v667
    %v737 = vunpack.c.l.b16 %v668
    %v738 = vunpack.c.l.b16 %v669
    %v739 = vunpack.c.h.b16 %v669
    %v740 = vunpack.c.l.b16 %v670
    %v741 = vunpack.c.l.b16 %v671
    %v742 = vunpack.c.h.b16 %v671
    %v743 = vunpack.c.l.b16 %v672
    %v744 = vunpack.c.l.b16 %v673
    %v745 = vunpack.c.h.b16 %v673
    %v746 = vunpack.c.l.b16 %v674
    %v747 = vunpack.c.l.b16 %v675
    %v748 = vunpack.c.h.b16 %v675
    %v749 = vunpack.c.l.b16 %v676
    %v750 = vunpack.c.l.b16 %v677
    %v751 = vunpack.c.h.b16 %v677
    %v752 = vunpack.c.l.b16 %v678
    %v753 = vunpack.c.l.b16 %v679
    %v754 = vunpack.c.h.b16 %v679
    %v755 = vunpack.c.l.b16 %v680
    %v756 = vunpack.c.l.b16 %v681
    %v757 = vunpack.c.h.b16 %v681
    %v758 = vunpack.c.l.b16 %v682
    %v759 = vunpack.c.l.b16 %v683
    %v760 = vunpack.c.h.b16 %v683
    %v761 = vunpack.c.l.b16 %v684
    %v762 = vunpack.c.l.b16 %v685
    %v763 = vunpack.c.h.b16 %v685
    %v764 = vunpack.c.l.b16 %v686
    %v765 = vunpack.c.l.b16 %v687
    %v766 = vunpack.c.h.b16 %v687
    %v767 = vunpack.c.l.b16 %v688
    %v768 = vunpack.c.l.b16 %v689
    %v769 = vunpack.c.h.b16 %v689
    %v770 = vunpack.c.l.b16 %v690
    %v771 = vpack.c.b16 %v726, %v723
    %v772 = vpack.c.b16 %v727, %v724
    %v773 = vpack.c.b16 %v728, %v725
    %v774 = vpack.c.b16 %v732, %v729
    %v775 = vpack.c.b16 %v733, %v730
    %v776 = vpack.c.b16 %v734, %v731
    %v777 = vpack.c.b16 %v738, %v735
    %v778 = vpack.c.b16 %v739, %v736
    %v779 = vpack.c.b16 %v740, %v737
    %v780 = vpack.c.b16 %v744, %v741
    %v781 = vpack.c.b16 %v745, %v742
    %v782 = vpack.c.b16 %v746, %v743
    %v783 = vpack.c.b16 %v750, %v747
    %v784 = vpack.c.b16 %v751, %v748
    %v785 = vpack.c.b16 %v752, %v749
    %v786 = vpack.c.b16 %v756, %v753
    %v787 = vpack.c.b16 %v757, %v754
    %v788 = vpack.c.b16 %v758, %v755
    %v789 = vpack.c.b16 %v762, %v759
    %v790 = vpack.c.b16 %v763, %v760
    %v791 = vpack.c.b16 %v764, %v761
    %v792 = vpack.c.b16 %v768, %v765
    %v793 = vpack.c.b16 %v769, %v766
    %v794 = vpack.c.b16 %v770, %v767
    %819 = vmatprep.subr.bf16.mxu0 %v772
    %820 = vmatpush1.bf16.msra.mxu0 %v771
    %821 = vmatprep.subr.bf16.mxu0 %v775
    %822 = vmatpush1.bf16.msra.mxu0 %v774
    %823 = vmatprep.subr.bf16.mxu0 %v778
    %824 = vmatpush1.bf16.msra.mxu0 %v777
    %825 = vmatprep.subr.bf16.mxu0 %v781
    %826 = vmatpush1.bf16.msra.mxu0 %v780
    %827 = vmatprep.subr.bf16.mxu0 %v784
    %828 = vmatpush1.bf16.msra.mxu0 %v783
    %829 = vmatprep.subr.bf16.mxu0 %v787
    %830 = vmatpush1.bf16.msra.mxu0 %v786
    %831 = vmatprep.subr.bf16.mxu0 %v790
    %832 = vmatpush1.bf16.msra.mxu0 %v789
    %833 = vmatprep.subr.bf16.mxu0 %v793
    %834 = vmatpush1.bf16.msra.mxu0 %v792
    %835 = vmatprep.subr.bf16.mxu0 0
    %836 = vmatpush1.bf16.msra.mxu0 0
    %837 = vmatprep.subr.bf16.mxu0 0
    %838 = vmatpush1.bf16.msra.mxu0 0
    %839 = vmatprep.subr.bf16.mxu0 0
    %840 = vmatpush1.bf16.msra.mxu0 0
    %841 = vmatprep.subr.bf16.mxu0 0
    %842 = vmatpush1.bf16.msra.mxu0 0
    %843 = vmatprep.subr.bf16.mxu0 0
    %844 = vmatpush1.bf16.msra.mxu0 0
    %845 = vmatprep.subr.bf16.mxu0 0
    %846 = vmatpush1.bf16.msra.mxu0 0
    %847 = vmatprep.subr.bf16.mxu0 0
    %848 = vmatpush1.bf16.msra.mxu0 0
    %849 = vmatprep.subr.bf16.mxu0 0
    %850 = vmatpush1.bf16.msra.mxu0 0
    %851 = vmatprep.mubr.bf16.mxu0 0
    %852 = vmatmul.mubr.bf16.gmra.mrb[0].mxu0 %v658
    %v853 = vpop.f32.mrb[0].mxu0
    %v854 = vadd.f32 0.0, %v853
    %v855 = vpop.f32.mrb[0].mxu0
    %v856 = vadd.f32 0.0, %v855
    %v857 = vpop.f32.mrb[0].mxu0
    %v858 = vpop.f32.mrb[0].mxu0
    %859 = vdwg.mxu0
    %860 = vmatprep.subr.bf16.mxu0 0
    %861 = vmatpush1.bf16.msra.mxu0 %v773
    %862 = vmatprep.subr.bf16.mxu0 0
    %863 = vmatpush1.bf16.msra.mxu0 %v776
    %864 = vmatprep.subr.bf16.mxu0 0
    %865 = vmatpush1.bf16.msra.mxu0 %v779
    %866 = vmatprep.subr.bf16.mxu0 0
    %867 = vmatpush1.bf16.msra.mxu0 %v782
    %868 = vmatprep.subr.bf16.mxu0 0
    %869 = vmatpush1.bf16.msra.mxu0 %v785
    %870 = vmatprep.subr.bf16.mxu0 0
    %871 = vmatpush1.bf16.msra.mxu0 %v788
    %872 = vmatprep.subr.bf16.mxu0 0
    %873 = vmatpush1.bf16.msra.mxu0 %v791
    %874 = vmatprep.subr.bf16.mxu0 0
    %875 = vmatpush1.bf16.msra.mxu0 %v794
    %876 = vmatprep.subr.bf16.mxu0 0
    %877 = vmatpush1.bf16.msra.mxu0 0
    %878 = vmatprep.subr.bf16.mxu0 0
    %879 = vmatpush1.bf16.msra.mxu0 0
    %880 = vmatprep.subr.bf16.mxu0 0
    %881 = vmatpush1.bf16.msra.mxu0 0
    %882 = vmatprep.subr.bf16.mxu0 0
    %883 = vmatpush1.bf16.msra.mxu0 0
    %884 = vmatprep.subr.bf16.mxu0 0
    %885 = vmatpush1.bf16.msra.mxu0 0
    %886 = vmatprep.subr.bf16.mxu0 0
    %887 = vmatpush1.bf16.msra.mxu0 0
    %888 = vmatprep.subr.bf16.mxu0 0
    %889 = vmatpush1.bf16.msra.mxu0 0
    %890 = vmatprep.subr.bf16.mxu0 0
    %891 = vmatpush1.bf16.msra.mxu0 0
    %892 = vmatprep.mubr.bf16.mxu0 0
    %893 = vmatmul.mubr.bf16.gmra.mrb[0].mxu0 %v658
    %v894 = vpop.f32.mrb[0].mxu0
    %v895 = vadd.f32 0.0, %v894
    %v896 = vpop.f32.mrb[0].mxu0
    %v897 = vpop.f32.mrb[0].mxu0
    %v898 = vpop.f32.mrb[0].mxu0
    %899 = vdwg.mxu0
    %v900 = vpack.c.bf16 %v854, %v854
    %v901 = vpack.c.bf16 %v856, %v856
    %v902 = vpack.c.bf16 %v895, %v895
    %v906 = vcombine.low %v900, %v901
    %v908 = vunpack.c.l.s4 1966171168
    %v909 = vunpack.c.0.s8 %v908
    %v910 = vlaneseq
    %v911 = vshrl.u32 %v910, 7
    %v912 = vsub.s32 %v909, %v911
    %v913 = vrot.slane %v906, %v912
    %v915 = vunpack.c.l.s4 1966171168
    %v916 = vunpack.c.0.s8 %v915
    %v917 = vlaneseq
    %v918 = vshrl.u32 %v917, 7
    %v919 = vsub.s32 %v916, %v918
    %v920 = vrot.slane %v902, %v919
    %v921 = vcombine.low %v913, %v920
    %v922 = vcombine.high %v913, %v920
    %v924 = vunpack.c.l.s4 1966171168
    %v925 = vunpack.c.0.s8 %v924
    %v926 = vlaneseq
    %v927 = vshrl.u32 %v926, 7
    %v928 = vsub.s32 %v925, %v927
    %v929 = vrot.slane %v921, %v928
    %v931 = vunpack.c.l.s4 1966171168
    %v932 = vunpack.c.0.s8 %v931
    %v933 = vlaneseq
    %v934 = vshrl.u32 %v933, 7
    %v935 = vsub.s32 %v932, %v934
    %v936 = vrot.slane %v922, %v935
    %v937 = vcombine.high %v929, %v929
    %v938 = vcombine.high %v936, %v936
    %943 = vst [vmem:[#allocation10] sm:$0x7] %v929
    %944 = vst [vmem:[#allocation10 + $0x3] sm:$0x7] %v936
    %945 = vst [vmem:[#allocation10 + $0x6] sm:$0x7] %v937
    %946 = vst [vmem:[#allocation10 + $0x9] sm:$0x7] %v938
    // Predicated region
    $region34: #{tpu_custom_call.1} parent=1 // pred_check
      _
    $region35: #{tpu_custom_call.1} parent=1 // pred_check_branch
      %948 = sbr.rel (0) target = $region37
    $region36: #{tpu_custom_call.1} parent=1 // pred_region
      %s950 = ssub.s32 192, 48
      %951 = vsyncadd [#allocation4], %s950
      %s952 = sshll.u32 [#allocation10], 4
      %s953 = int_to_ptr.vmem [resolvable:$true] %s952
      %958 = dma.vmem_to_hbm [thread:$0]  %s953, 48, %s4, [#allocation4], 48, 48, 3
    $region37: #{tpu_custom_call.1} parent=1 // pred_fallthru
      _
    // Predicated region
    $region38: #{tpu_custom_call.1} parent=1 // pred_check
      _
    $region39: #{tpu_custom_call.1} parent=1 // pred_check_branch
      %960 = sbr.rel (0) target = $region41
    $region40: #{tpu_custom_call.1} parent=1 // pred_region
      %961 = dma.done [#allocation4], 192
    $region41: #{tpu_custom_call.1} parent=1 // pred_fallthru
      _
    %962 = vsyncpa [#allocation3], 1
    %963 = vsyncpa [#allocation6], 1
    %964 = vsyncpa [#allocation9], 1
    %965 = vsyncpa [#allocation4], 1

</llo_original>
